<compile_context>
chip_gen: v7x
topology: tpu7x:2x2x1
jax: 0.10.0
libtpu: 0.0.40
codegen_flags: <defaults>
</compile_context>

<pallas_src>
import functools
import math

import jax
import jax.numpy as jnp
from jax.experimental import pallas as pl
from jax.experimental.pallas import tpu as pltpu

_EPS = 1e-12  # F.normalize eps


def _arc_margin_kernel(x_ref, w_ref, t_ref, out_ref, wn_ref, *,
                       margin, s, tile_c, compute_dtype):
    b = pl.program_id(1)

    # Normalize the weight tile's columns once per C tile; the weight block
    # index only depends on the C grid axis, so this block is identical for
    # every inner batch iteration and the normalized copy is cached in VMEM.
    @pl.when(b == 0)
    def _():
        w = w_ref[...]                                        # (D, TILE_C) f32
        inv_wn = jax.lax.rsqrt(
            jnp.maximum(jnp.sum(w * w, axis=0, keepdims=True), _EPS * _EPS))
        wn_ref[...] = (w * inv_wn).astype(wn_ref.dtype)

    # Row-normalize the batch tile (F.normalize(x, 2, dim=1)).
    x = x_ref[...]                                            # (TILE_B, D) f32
    inv_xn = jax.lax.rsqrt(
        jnp.maximum(jnp.sum(x * x, axis=1, keepdims=True), _EPS * _EPS))
    xn = (x * inv_xn).astype(compute_dtype)

    # cos_theta on the MXU, f32 accumulation.
    cos = jnp.dot(xn, wn_ref[...], preferred_element_type=jnp.float32)

    # ArcFace margin: cos(theta + m) = cos*cos(m) - sin*sin(m).
    sin = jnp.sqrt(jnp.maximum(1.0 - cos * cos, 0.0))
    cos_m = cos * math.cos(margin) - sin * math.sin(margin)

    # one-hot select: only the target class gets s * cos_theta_m, everything
    # else keeps the un-scaled cos_theta (matches the PyTorch module exactly).
    tgt = t_ref[...]                                          # (TILE_B, 1) i32
    col = (jax.lax.broadcasted_iota(jnp.int32, cos.shape, 1)
           + pl.program_id(0) * tile_c)
    out_ref[...] = jnp.where(col == tgt, s * cos_m, cos)


def arc_margin_linear(inputs, weight, targets, *, margin, s,
                      tile_b=128, tile_c=512,
                      compute_dtype=jnp.bfloat16):
    """ArcMarginLinear forward.

    inputs:  (B, D) float32
    weight:  (D, C) float32
    targets: (B,)   integer class ids
    compute_dtype: MXU input dtype (bf16 = fast path, f32 = exact parity).
    """
    B, D = inputs.shape
    D2, C = weight.shape
    assert D == D2, (D, D2)

    tile_b = min(tile_b, B)
    tile_c = min(tile_c, C)
    grid = (pl.cdiv(C, tile_c), pl.cdiv(B, tile_b))   # C outer, B inner

    tgt2d = targets.reshape(B, 1).astype(jnp.int32)

    kernel = functools.partial(
        _arc_margin_kernel, margin=margin, s=s, tile_c=tile_c,
        compute_dtype=compute_dtype)

    # VMEM budget from the actual tiles (double-buffered ins/outs + scratch),
    # capped at 48 MiB so it also fits within v7x's 64 MiB physical VMEM.
    cbytes = jnp.dtype(compute_dtype).itemsize
    est = (2 * (tile_b * D + D * tile_c + tile_b * 1 + tile_b * tile_c) * 4
           + D * tile_c * cbytes)
    vmem_limit = max(32 << 20, min(int(est * 1.5) + (4 << 20), 48 << 20))

    return pl.pallas_call(
        kernel,
        out_shape=jax.ShapeDtypeStruct((B, C), jnp.float32),
        grid_spec=pltpu.PrefetchScalarGridSpec(
            num_scalar_prefetch=0,
            grid=grid,
            in_specs=[
                pl.BlockSpec((tile_b, D), lambda c, b: (b, 0)),
                pl.BlockSpec((D, tile_c), lambda c, b: (0, c)),
                pl.BlockSpec((tile_b, 1), lambda c, b: (b, 0)),
            ],
            out_specs=pl.BlockSpec((tile_b, tile_c), lambda c, b: (b, c)),
            scratch_shapes=[pltpu.VMEM((D, tile_c), compute_dtype)],
        ),
        compiler_params=pltpu.CompilerParams(
            # b (inner) carries the cached normalized-W scratch -> arbitrary;
            # c (outer) is independent -> parallel (megacore splits over C).
            dimension_semantics=("parallel", "arbitrary"),
            vmem_limit_bytes=vmem_limit,
        ),
    )(inputs, weight, tgt2d)


def _reference(inputs, weight, targets, *, margin, s,
               compute_dtype=jnp.float32):
    xn = inputs / jnp.maximum(
        jnp.linalg.norm(inputs, axis=1, keepdims=True), _EPS)
    wn = weight / jnp.maximum(
        jnp.linalg.norm(weight, axis=0, keepdims=True), _EPS)
    cos = jnp.dot(xn.astype(compute_dtype), wn.astype(compute_dtype),
                  preferred_element_type=jnp.float32)
    sin = jnp.sqrt(jnp.maximum(1.0 - cos * cos, 0.0))
    cos_m = cos * math.cos(margin) - sin * math.sin(margin)
    one_hot = jax.nn.one_hot(targets, weight.shape[1], dtype=cos.dtype)
    return s * (one_hot * cos_m) + (1.0 - one_hot) * cos


if __name__ == "__main__":
    B, FEAT_DIM, NUM_CLASSES = 16, 64, 1024
    MARGIN, S = 0.5, 30.0

    key = jax.random.PRNGKey(0)
    kx, kw, kt = jax.random.split(key, 3)

    inputs = jax.random.normal(kx, (B, FEAT_DIM), dtype=jnp.float32)
    # Xavier-uniform init (torch: fan_in = size(1), fan_out = size(0)).
    bound = math.sqrt(6.0 / (FEAT_DIM + NUM_CLASSES))
    weight = jax.random.uniform(kw, (FEAT_DIM, NUM_CLASSES),
                                dtype=jnp.float32, minval=-bound, maxval=bound)
    targets = jax.random.randint(kt, (B,), 0, NUM_CLASSES, dtype=jnp.int32)

    # Small tiles so the demo exercises the 2-D grid (C tiles x B tiles), the
    # per-C-tile weight-normalization cache and weight-tile DMA reuse.
    run = functools.partial(arc_margin_linear, inputs, weight, targets,
                            margin=MARGIN, s=S, tile_b=8, tile_c=512)

    # 1) Full-f32 compute path: matches the PyTorch module semantics tightly.
    out_f32 = jax.block_until_ready(run(compute_dtype=jnp.float32))
    ref_f32 = _reference(inputs, weight, targets, margin=MARGIN, s=S)
    assert out_f32.shape == (B, NUM_CLASSES)
    assert jnp.allclose(out_f32, ref_f32, atol=1e-3, rtol=1e-3), "f32 mismatch"

    # 2) Default bf16-MXU fast path: compare against a reference that applies
    #    the same bf16 rounding to the normalized operands.
    out_bf16 = jax.block_until_ready(run())
    ref_bf16 = _reference(inputs, weight, targets, margin=MARGIN, s=S,
                          compute_dtype=jnp.bfloat16)
    assert jnp.allclose(out_bf16, ref_bf16, atol=5e-2, rtol=2e-2), \
        "bf16 mismatch"

    print("KERNEL_OK")
</pallas_src>

<mosaic_0001>
module attributes {stable_mosaic.version = 11 : i64} {
  func.func @_arc_margin_kernel(%arg0: i32, %arg1: i32, %arg2: memref<8x64xf32, #tpu.memory_space<vmem>>, %arg3: memref<64x512xf32, #tpu.memory_space<vmem>>, %arg4: memref<8x1xi32, #tpu.memory_space<vmem>>, %arg5: memref<8x512xf32, #tpu.memory_space<vmem>>, %arg6: memref<64x512xf32, #tpu.memory_space<vmem>>) attributes {dimension_semantics = [#tpu.dimension_semantics<parallel>, #tpu.dimension_semantics<arbitrary>], iteration_bounds = array<i64: 2, 2>, scalar_prefetch = 0 : i64, scratch_operands = 1 : i64, tpu.core_type = #tpu.core_type<tc>, window_params = [{transform_indices = @transform_0, window_bounds = array<i64: 8, 64>}, {transform_indices = @transform_1, window_bounds = array<i64: 64, 512>}, {transform_indices = @transform_2, window_bounds = array<i64: 8, 1>}, {transform_indices = @transform_3, window_bounds = array<i64: 8, 512>}]} {
    %c0_i32 = arith.constant 0 : i32
    %0 = arith.cmpi eq, %arg1, %c0_i32 : i32
    %1 = arith.extui %0 : i1 to i32
    %c0_i32_0 = arith.constant 0 : i32
    %2 = arith.cmpi ne, %1, %c0_i32_0 : i32
    scf.if %2 {
      %c0_15 = arith.constant 0 : index
      %c0_16 = arith.constant 0 : index
      %36 = vector.load %arg3[%c0_15, %c0_16] : memref<64x512xf32, #tpu.memory_space<vmem>>, vector<64x512xf32>
      %37 = arith.mulf %36, %36 : vector<64x512xf32>
      %cst_17 = arith.constant dense<0.000000e+00> : vector<512xf32>
      %38 = vector.multi_reduction <add>, %37, %cst_17 [0] : vector<64x512xf32> to vector<512xf32>
      %39 = vector.shape_cast %38 : vector<512xf32> to vector<1x512xf32>
      %cst_18 = arith.constant 1.000000e-24 : f32
      %40 = vector.broadcast %cst_18 : f32 to vector<1x512xf32>
      %41 = arith.maximumf %39, %40 : vector<1x512xf32>
      %42 = math.rsqrt %41 : vector<1x512xf32>
      %43 = vector.broadcast %42 : vector<1x512xf32> to vector<64x512xf32>
      %44 = arith.mulf %36, %43 : vector<64x512xf32>
      %c0_19 = arith.constant 0 : index
      %c0_20 = arith.constant 0 : index
      %45 = vector.load %arg6[%c0_19, %c0_20] : memref<64x512xf32, #tpu.memory_space<vmem>>, vector<64x512xf32>
      tpu.vector_store %arg6[%c0_19, %c0_20], %44 {strides = array<i32>} : memref<64x512xf32, #tpu.memory_space<vmem>>, vector<64x512xf32>,
    } else {
    }
    %c0 = arith.constant 0 : index
    %c0_1 = arith.constant 0 : index
    %3 = vector.load %arg2[%c0, %c0_1] : memref<8x64xf32, #tpu.memory_space<vmem>>, vector<8x64xf32>
    %4 = arith.mulf %3, %3 : vector<8x64xf32>
    %cst = arith.constant dense<0.000000e+00> : vector<8xf32>
    %5 = vector.multi_reduction <add>, %4, %cst [1] : vector<8x64xf32> to vector<8xf32>
    %6 = vector.shape_cast %5 : vector<8xf32> to vector<8x1xf32>
    %cst_2 = arith.constant 1.000000e-24 : f32
    %7 = vector.broadcast %cst_2 : f32 to vector<8x1xf32>
    %8 = arith.maximumf %6, %7 : vector<8x1xf32>
    %9 = math.rsqrt %8 : vector<8x1xf32>
    %10 = vector.broadcast %9 : vector<8x1xf32> to vector<8x64xf32>
    %11 = arith.mulf %3, %10 : vector<8x64xf32>
    %c0_3 = arith.constant 0 : index
    %c0_4 = arith.constant 0 : index
    %12 = vector.load %arg6[%c0_3, %c0_4] : memref<64x512xf32, #tpu.memory_space<vmem>>, vector<64x512xf32>
    %cst_5 = arith.constant dense<0.000000e+00> : vector<8x512xf32>
    %13 = tpu.matmul %11, %12, %cst_5 {dimension_numbers = #tpu.dot_dimension_numbers<[1], [0], [0], [1], [0, 0, 1, 1], [], []>} : vector<8x64xf32>, vector<64x512xf32>, vector<8x512xf32> -> vector<8x512xf32>
    %14 = arith.mulf %13, %13 : vector<8x512xf32>
    %cst_6 = arith.constant 1.000000e+00 : f32
    %15 = vector.broadcast %cst_6 : f32 to vector<8x512xf32>
    %16 = arith.subf %15, %14 : vector<8x512xf32>
    %cst_7 = arith.constant 0.000000e+00 : f32
    %17 = vector.broadcast %cst_7 : f32 to vector<8x512xf32>
    %18 = arith.maximumf %16, %17 : vector<8x512xf32>
    %19 = math.sqrt %18 : vector<8x512xf32>
    %cst_8 = arith.constant 0.87758255 : f32
    %20 = vector.broadcast %cst_8 : f32 to vector<8x512xf32>
    %21 = arith.mulf %13, %20 : vector<8x512xf32>
    %cst_9 = arith.constant 0.47942555 : f32
    %22 = vector.broadcast %cst_9 : f32 to vector<8x512xf32>
    %23 = arith.mulf %19, %22 : vector<8x512xf32>
    %24 = arith.subf %21, %23 : vector<8x512xf32>
    %c0_10 = arith.constant 0 : index
    %c0_11 = arith.constant 0 : index
    %25 = vector.load %arg4[%c0_10, %c0_11] : memref<8x1xi32, #tpu.memory_space<vmem>>, vector<8x1xi32>
    %26 = tpu.iota {dimensions = array<i32: 1>} : vector<8x512xi32>
    %c512_i32 = arith.constant 512 : i32
    %27 = arith.muli %arg0, %c512_i32 : i32
    %28 = vector.broadcast %27 : i32 to vector<8x512xi32>
    %29 = arith.addi %26, %28 : vector<8x512xi32>
    %30 = vector.broadcast %25 : vector<8x1xi32> to vector<8x512xi32>
    %31 = arith.cmpi eq, %29, %30 : vector<8x512xi32>
    %cst_12 = arith.constant 3.000000e+01 : f32
    %32 = vector.broadcast %cst_12 : f32 to vector<8x512xf32>
    %33 = arith.mulf %32, %24 : vector<8x512xf32>
    %34 = arith.select %31, %33, %13 : vector<8x512xi1>, vector<8x512xf32>
    %c0_13 = arith.constant 0 : index
    %c0_14 = arith.constant 0 : index
    %35 = vector.load %arg5[%c0_13, %c0_14] : memref<8x512xf32, #tpu.memory_space<vmem>>, vector<8x512xf32>
    tpu.vector_store %arg5[%c0_13, %c0_14], %34 {strides = array<i32>} : memref<8x512xf32, #tpu.memory_space<vmem>>, vector<8x512xf32>,
    return
  }
  func.func @transform_0(%arg0: i32, %arg1: i32) -> (i32, i32) {
    %c0_i32 = arith.constant 0 : i32
    %c0_i32_0 = arith.constant 0 : i32
    return %arg1, %c0_i32 : i32, i32
  }
  func.func @transform_1(%arg0: i32, %arg1: i32) -> (i32, i32) {
    %c0_i32 = arith.constant 0 : i32
    %c0_i32_0 = arith.constant 0 : i32
    return %c0_i32, %arg0 : i32, i32
  }
  func.func @transform_2(%arg0: i32, %arg1: i32) -> (i32, i32) {
    %c0_i32 = arith.constant 0 : i32
    %c0_i32_0 = arith.constant 0 : i32
    return %arg1, %c0_i32 : i32, i32
  }
  func.func @transform_3(%arg0: i32, %arg1: i32) -> (i32, i32) {
    %c0_i32 = arith.constant 0 : i32
    return %arg1, %arg0 : i32, i32
  }
}

</mosaic_0001>

<llo_original>
// kernel: tpu_custom_call.1
$region0: #{tpu_custom_call.1}
  #allocation0 [shape = 'u32[]', space=smem, size = 0x4, offset = 0x4, fixed_abs, tag = 'smem constant byte address 0x4 - core index']
  #allocation1 [shape = 'u32[144,128]{1,0:T(1,128)}', space=vmem, size = 0x12000, scoped, tag = 'internal scratch']
  #allocation2 [shape = 'f32[64,512]{1,0:T(8,128)}', space=vmem, size = 0x20000, scoped, tag = 'scratch operand']
  %s0 = inlined_call_operand.vmem [shape: f32[16,64], index: 0, kind: input, shape index: {}]
  %s1 = inlined_call_operand.hbm [shape: f32[64,1024], index: 1, kind: input, shape index: {}]
  %s2 = inlined_call_operand.vmem [shape: s32[16,1], index: 2, kind: input, shape index: {}]
  %s3 = inlined_call_operand.hbm [shape: f32[16,1024], index: 3, kind: output, shape index: {}]
  %s4 = sld [smem:[#allocation0]]
  $region53: #{tpu_custom_call.1} parent=0
    _
  %s6 = ssub.s32 1, %s4
  %s7 = scalar_select 0, %s6, %s4
  $region1: #{tpu_custom_call.1} parent=0
    #allocation3 [shape = 'u8[262144]{0}', space=vmem, size = 0x40000, scoped, tag = 'input window, operand 1']
    #allocation4 [shape = 's32[2]{0}', space=sflag, size = 0x8, scoped, tag = 'scoped memory for tpu_custom_call.1']
    #allocation5 [shape = 's32[2]{0}', space=sflag, size = 0x8, scoped, tag = 'scoped memory for tpu_custom_call.1']
    #allocation6 [shape = 'u8[32768]{0}', space=vmem, size = 0x8000, scoped, tag = 'output window, operand 0']
    %8 = vsyncpa [#allocation4], 0
    %s9 = scalar_lea.sflag [#allocation4], 1
    %10 = vsyncpa %s9, 0
    %11 = vsyncpa [#allocation5], 0
    %s12 = scalar_lea.sflag [#allocation5], 1
    %13 = vsyncpa %s12, 0
    loop: start=0, step=1, limit=6
    $region2: #{tpu_custom_call.1} parent=1 // loop_pre_header
      _
    $region3: #{tpu_custom_call.1} parent=1 // loop_header
      %s15 = sphi 0, %s19
      %p16 = scmp.ge.s32.totalorder %s15, 6
      %s22 = sphi 0, %s34
      %s23 = sphi 0, %s30
      %s24 = sphi 0, %s22
      %s25 = sphi 0, %s23
      %s26 = sphi 0, %s24
      %s27 = sphi 0, %s25
      %s37 = sphi 0, %s39
      %s40 = sphi 0, %s37
      %s41 = sphi 0, %s40
      %s57 = sphi 0, %s41
      %s63 = sphi 0, %s65
      %s66 = sphi 0, %s63
      %s67 = sphi 0, %s66
      %s83 = sphi 0, %s67
      %s89 = sphi 0, %s91
      %s92 = sphi 0, %s89
      %s93 = sphi 0, %s92
      %s109 = sphi 0, %s93
      %s117 = sphi 0, %s119
      %s120 = sphi 0, %s117
      %s121 = sphi 0, %s120
      %s137 = sphi 0, %s121
    $region4: #{tpu_custom_call.1} parent=1 // loop_header_branch
      %18 = sbr.rel (%p16) target = $region8
    $region5: #{tpu_custom_call.1} parent=1 // loop_body
      %s20 = ssub.s32 %s15, 1
      %s21 = ssub.s32 %s15, 2
      %s28 = sadd.s32 1, %s23
      %p29 = scmp.ge.s32.totalorder %s28, 2
      %s30 = scalar_select %p29, 0, %s28
      %s31 = sadd.s32 1, %s22
      %s32 = scalar_select %p29, %s31, %s22
      %p33 = scmp.ge.s32.totalorder %s32, 2
      %s34 = scalar_select %p33, 0, %s32
      %s35 = ssub.s32 %s23, %s30
      %p36 = scmp.eq.s32.totalorder %s35, 0
      %s38 = sadd.s32 %s37, 1
      %s39 = scalar_select %p36, %s37, %s38
      %p42 = pneg %p36
      %p43 = scmp.eq.s32.totalorder %s15, 3
      %p44 = por %p42, %p43
      %p45 = scmp.ne.s32.totalorder %s37, %s40
      %p46 = scmp.eq.s32.totalorder %s15, 0
      %p47 = por %p45, %p46
      %p48 = scmp.ne.s32.totalorder %s37, %s40
      %p49 = scmp.eq.s32.totalorder %s20, 3
      %p50 = por %p48, %p49
      %p51 = scmp.ne.s32.totalorder %s40, %s41
      %p52 = scmp.eq.s32.totalorder %s20, 0
      %p53 = por %p51, %p52
      %p54 = scmp.ne.s32.totalorder %s40, %s41
      %p55 = scmp.eq.s32.totalorder %s21, 3
      %p56 = por %p54, %p55
      %p58 = scmp.ne.s32.totalorder %s41, %s57
      %p59 = scmp.eq.s32.totalorder %s21, 0
      %p60 = por %p58, %p59
      %s61 = ssub.s32 %s22, %s34
      %p62 = scmp.eq.s32.totalorder %s61, 0
      %s64 = sadd.s32 %s63, 1
      %s65 = scalar_select %p62, %s63, %s64
      %p68 = pneg %p62
      %p69 = scmp.eq.s32.totalorder %s15, 3
      %p70 = por %p68, %p69
      %p71 = scmp.ne.s32.totalorder %s63, %s66
      %p72 = scmp.eq.s32.totalorder %s15, 0
      %p73 = por %p71, %p72
      %p74 = scmp.ne.s32.totalorder %s63, %s66
      %p75 = scmp.eq.s32.totalorder %s20, 3
      %p76 = por %p74, %p75
      %p77 = scmp.ne.s32.totalorder %s66, %s67
      %p78 = scmp.eq.s32.totalorder %s20, 0
      %p79 = por %p77, %p78
      %p80 = scmp.ne.s32.totalorder %s66, %s67
      %p81 = scmp.eq.s32.totalorder %s21, 3
      %p82 = por %p80, %p81
      %p84 = scmp.ne.s32.totalorder %s67, %s83
      %p85 = scmp.eq.s32.totalorder %s21, 0
      %p86 = por %p84, %p85
      %s87 = ssub.s32 %s23, %s30
      %p88 = scmp.eq.s32.totalorder %s87, 0
      %s90 = sadd.s32 %s89, 1
      %s91 = scalar_select %p88, %s89, %s90
      %p94 = pneg %p88
      %p95 = scmp.eq.s32.totalorder %s15, 3
      %p96 = por %p94, %p95
      %p97 = scmp.ne.s32.totalorder %s89, %s92
      %p98 = scmp.eq.s32.totalorder %s15, 0
      %p99 = por %p97, %p98
      %p100 = scmp.ne.s32.totalorder %s89, %s92
      %p101 = scmp.eq.s32.totalorder %s20, 3
      %p102 = por %p100, %p101
      %p103 = scmp.ne.s32.totalorder %s92, %s93
      %p104 = scmp.eq.s32.totalorder %s20, 0
      %p105 = por %p103, %p104
      %p106 = scmp.ne.s32.totalorder %s92, %s93
      %p107 = scmp.eq.s32.totalorder %s21, 3
      %p108 = por %p106, %p107
      %p110 = scmp.ne.s32.totalorder %s93, %s109
      %p111 = scmp.eq.s32.totalorder %s21, 0
      %p112 = por %p110, %p111
      %s113 = ssub.s32 %s23, %s30
      %s114 = ssub.s32 %s22, %s34
      %s115 = sor.u32 %s113, %s114
      %p116 = scmp.eq.s32.totalorder %s115, 0
      %s118 = sadd.s32 %s117, 1
      %s119 = scalar_select %p116, %s117, %s118
      %p122 = pneg %p116
      %p123 = scmp.eq.s32.totalorder %s15, 3
      %p124 = por %p122, %p123
      %p125 = scmp.ne.s32.totalorder %s117, %s120
      %p126 = scmp.eq.s32.totalorder %s15, 0
      %p127 = por %p125, %p126
      %p128 = scmp.ne.s32.totalorder %s117, %s120
      %p129 = scmp.eq.s32.totalorder %s20, 3
      %p130 = por %p128, %p129
      %p131 = scmp.ne.s32.totalorder %s120, %s121
      %p132 = scmp.eq.s32.totalorder %s20, 0
      %p133 = por %p131, %p132
      %p134 = scmp.ne.s32.totalorder %s120, %s121
      %p135 = scmp.eq.s32.totalorder %s21, 3
      %p136 = por %p134, %p135
      %p138 = scmp.ne.s32.totalorder %s121, %s137
      %p139 = scmp.eq.s32.totalorder %s21, 0
      %p140 = por %p138, %p139
      %p141 = scmp.le.s32.totalorder 1, %s15
      %p142 = scmp.lt.s32.totalorder %s15, 5
      %p143 = pnand %p141, %p142
      %p144 = pneg %p143
      // Predicated region
      $region9: #{tpu_custom_call.1} parent=5 // pred_check
        _
      $region10: #{tpu_custom_call.1} parent=5 // pred_check_branch
        %146 = sbr.rel (%p143) target = $region12
      $region11: #{tpu_custom_call.1} parent=5 // pred_region
        %s147 = ssub.s32 %s15, 1
      $region12: #{tpu_custom_call.1} parent=5 // pred_fallthru
        _
      %p148 = scmp.lt.s32.totalorder %s15, 4
      // Predicated region
      $region13: #{tpu_custom_call.1} parent=5 // pred_check
        %p149 = pneg %p148
      $region14: #{tpu_custom_call.1} parent=5 // pred_check_branch
        %151 = sbr.rel (%p149) target = $region16
      $region15: #{tpu_custom_call.1} parent=5 // pred_region
        // Predicated region
        $region17: #{tpu_custom_call.1} parent=15 // pred_check
          %p152 = pneg %p47
        $region18: #{tpu_custom_call.1} parent=15 // pred_check_branch
          %154 = sbr.rel (%p152) target = $region20
        $region19: #{tpu_custom_call.1} parent=15 // pred_region
          %p155 = scmp.lt.s32.totalorder %s23, 1
          %s156 = scalar_select %p155, %s23, 1
          %s157 = smul.addr %s156, 8
          %s158 = scalar_lea.vmem %s0, %s157
        $region20: #{tpu_custom_call.1} parent=15 // pred_fallthru
          _
        // Predicated region
        $region21: #{tpu_custom_call.1} parent=15 // pred_check
          %p159 = pneg %p73
        $region22: #{tpu_custom_call.1} parent=15 // pred_check_branch
          %161 = sbr.rel (%p159) target = $region24
        $region23: #{tpu_custom_call.1} parent=15 // pred_region
          %s162 = sand.u32 %s63, 1
          %s163 = scalar_lea.sflag [#allocation4], %s162
          %s164 = sand.u32 %s63, 1
          %s165 = smul.addr %s164, 256
          %s166 = scalar_lea.vmem [#allocation3], %s165
          %s167 = smul.u32 4, %s22
          %s169 = ssub.s32 4096, 4096
          %170 = vsyncadd %s163, %s169
          %s171 = smul.addr %s167, 128
          %s172 = scalar_lea.hbm %s1, %s171
          %s173 = sshll.u32 %s166, 4
          %s174 = int_to_ptr.vmem [resolvable:$true] %s173
          %179 = dma.hbm_to_vmem [thread:$0]  %s172, 4096, %s174, %s163, 1024, 512, 32
        $region24: #{tpu_custom_call.1} parent=15 // pred_fallthru
          _
        // Predicated region
        $region25: #{tpu_custom_call.1} parent=15 // pred_check
          %p180 = pneg %p99
        $region26: #{tpu_custom_call.1} parent=15 // pred_check_branch
          %182 = sbr.rel (%p180) target = $region28
        $region27: #{tpu_custom_call.1} parent=15 // pred_region
          %p183 = scmp.lt.s32.totalorder %s23, 1
          %s184 = scalar_select %p183, %s23, 1
          %s185 = smul.addr %s184, 8
          %s186 = scalar_lea.vmem %s2, %s185
        $region28: #{tpu_custom_call.1} parent=15 // pred_fallthru
          _
      $region16: #{tpu_custom_call.1} parent=5 // pred_fallthru
        _
      %p187 = scmp.le.s32.totalorder 1, %s15
      %p188 = scmp.lt.s32.totalorder %s15, 5
      %p189 = pnand %p187, %p188
      %p190 = pneg %p189
      // Predicated region
      $region29: #{tpu_custom_call.1} parent=5 // pred_check
        _
      $region30: #{tpu_custom_call.1} parent=5 // pred_check_branch
        %192 = sbr.rel (%p189) target = $region32
      $region31: #{tpu_custom_call.1} parent=5 // pred_region
        %s193 = ssub.s32 %s15, 1
        %s194 = sand.u32 %s66, 1
        %s195 = scalar_lea.sflag [#allocation4], %s194
        %s196 = sand.u32 %s66, 1
        %s197 = smul.addr %s196, 256
        %s198 = scalar_lea.vmem [#allocation3], %s197
        // Predicated region
        $region33: #{tpu_custom_call.1} parent=31 // pred_check
          %p199 = pneg %p79
        $region34: #{tpu_custom_call.1} parent=31 // pred_check_branch
          %201 = sbr.rel (%p199) target = $region36
        $region35: #{tpu_custom_call.1} parent=31 // pred_region
          %202 = dma.done %s195, 4096
        $region36: #{tpu_custom_call.1} parent=31 // pred_fallthru
          _
        %p203 = scmp.lt.s32.totalorder %s25, 1
        %s204 = scalar_select %p203, %s25, 1
        %s205 = smul.addr %s204, 8
        %s206 = scalar_lea.vmem %s0, %s205
        %p207 = pneg %p53
        %p208 = pneg %p50
        %s209 = sand.u32 %s66, 1
        %s210 = scalar_lea.sflag [#allocation4], %s209
        %s211 = sand.u32 %s66, 1
        %s212 = smul.addr %s211, 256
        %s213 = scalar_lea.vmem [#allocation3], %s212
        %p214 = pneg %p79
        %p215 = pneg %p76
        %p216 = scmp.lt.s32.totalorder %s25, 1
        %s217 = scalar_select %p216, %s25, 1
        %s218 = smul.addr %s217, 8
        %s219 = scalar_lea.vmem %s2, %s218
        %p220 = pneg %p105
        %p221 = pneg %p102
        %p222 = pneg %p133
        %p223 = pneg %p130
        %s224 = sand.u32 %s120, 1
        %s225 = scalar_lea.sflag [#allocation5], %s224
        %s226 = sand.u32 %s120, 1
        %s227 = smul.addr %s226, 32
        %s228 = scalar_lea.vmem [#allocation6], %s227
        %p229 = scmp.lt.s32.totalorder %s25, 1
        %s230 = scalar_select %p229, %s25, 1
        %s231 = smul.addr %s230, 8
        %s232 = scalar_lea.vmem %s0, %s231
        %s233 = smul.u32 4, %s24
        %p234 = scmp.lt.s32.totalorder %s25, 1
        %s235 = scalar_select %p234, %s25, 1
        %s236 = smul.addr %s235, 8
        %s237 = scalar_lea.vmem %s2, %s236
        %s238 = smul.u32 4, %s24
        %p239 = scmp.eq.s32.totalorder %s25, 0
        // Predicated region
        $region37: #{tpu_custom_call.1} parent=31 // pred_check
          %p240 = pneg %p239
        $region38: #{tpu_custom_call.1} parent=31 // pred_check_branch
          %242 = sbr.rel (%p240) target = $region40
        $region39: #{tpu_custom_call.1} parent=31 // pred_region
          %v243 = vld [vmem:[%s198] sm:$0xff]
          %v244 = vld [vmem:[%s198 + $0x8] sm:$0xff]
          %v245 = vld [vmem:[%s198 + $0x10] sm:$0xff]
          %v246 = vld [vmem:[%s198 + $0x18] sm:$0xff]
          %v247 = vld [vmem:[%s198 + $0x20] sm:$0xff]
          %v248 = vld [vmem:[%s198 + $0x28] sm:$0xff]
          %v249 = vld [vmem:[%s198 + $0x30] sm:$0xff]
          %v250 = vld [vmem:[%s198 + $0x38] sm:$0xff]
          %v251 = vld [vmem:[%s198 + $0x40] sm:$0xff]
          %v252 = vld [vmem:[%s198 + $0x48] sm:$0xff]
          %v253 = vld [vmem:[%s198 + $0x50] sm:$0xff]
          %v254 = vld [vmem:[%s198 + $0x58] sm:$0xff]
          %v255 = vld [vmem:[%s198 + $0x60] sm:$0xff]
          %v256 = vld [vmem:[%s198 + $0x68] sm:$0xff]
          %v257 = vld [vmem:[%s198 + $0x70] sm:$0xff]
          %v258 = vld [vmem:[%s198 + $0x78] sm:$0xff]
          %v259 = vld [vmem:[%s198 + $0x80] sm:$0xff]
          %v260 = vld [vmem:[%s198 + $0x88] sm:$0xff]
          %v261 = vld [vmem:[%s198 + $0x90] sm:$0xff]
          %v262 = vld [vmem:[%s198 + $0x98] sm:$0xff]
          %v263 = vld [vmem:[%s198 + $0xa0] sm:$0xff]
          %v264 = vld [vmem:[%s198 + $0xa8] sm:$0xff]
          %v265 = vld [vmem:[%s198 + $0xb0] sm:$0xff]
          %v266 = vld [vmem:[%s198 + $0xb8] sm:$0xff]
          %v267 = vld [vmem:[%s198 + $0xc0] sm:$0xff]
          %v268 = vld [vmem:[%s198 + $0xc8] sm:$0xff]
          %v269 = vld [vmem:[%s198 + $0xd0] sm:$0xff]
          %v270 = vld [vmem:[%s198 + $0xd8] sm:$0xff]
          %v271 = vld [vmem:[%s198 + $0xe0] sm:$0xff]
          %v272 = vld [vmem:[%s198 + $0xe8] sm:$0xff]
          %v273 = vld [vmem:[%s198 + $0xf0] sm:$0xff]
          %v274 = vld [vmem:[%s198 + $0xf8] sm:$0xff]
          %v275 = vmul.f32 %v243, %v243
          %v276 = vmul.f32 %v244, %v244
          %v277 = vmul.f32 %v245, %v245
          %v278 = vmul.f32 %v246, %v246
          %v279 = vmul.f32 %v247, %v247
          %v280 = vmul.f32 %v248, %v248
          %v281 = vmul.f32 %v249, %v249
          %v282 = vmul.f32 %v250, %v250
          %v283 = vmul.f32 %v251, %v251
          %v284 = vmul.f32 %v252, %v252
          %v285 = vmul.f32 %v253, %v253
          %v286 = vmul.f32 %v254, %v254
          %v287 = vmul.f32 %v255, %v255
          %v288 = vmul.f32 %v256, %v256
          %v289 = vmul.f32 %v257, %v257
          %v290 = vmul.f32 %v258, %v258
          %v291 = vmul.f32 %v259, %v259
          %v292 = vmul.f32 %v260, %v260
          %v293 = vmul.f32 %v261, %v261
          %v294 = vmul.f32 %v262, %v262
          %v295 = vmul.f32 %v263, %v263
          %v296 = vmul.f32 %v264, %v264
          %v297 = vmul.f32 %v265, %v265
          %v298 = vmul.f32 %v266, %v266
          %v299 = vmul.f32 %v267, %v267
          %v300 = vmul.f32 %v268, %v268
          %v301 = vmul.f32 %v269, %v269
          %v302 = vmul.f32 %v270, %v270
          %v303 = vmul.f32 %v271, %v271
          %v304 = vmul.f32 %v272, %v272
          %v305 = vmul.f32 %v273, %v273
          %v306 = vmul.f32 %v274, %v274
          %v307 = vadd.f32 %v275, %v279
          %v308 = vadd.f32 %v307, %v283
          %v309 = vadd.f32 %v308, %v287
          %v310 = vadd.f32 %v309, %v291
          %v311 = vadd.f32 %v310, %v295
          %v312 = vadd.f32 %v311, %v299
          %v313 = vadd.f32 %v312, %v303
          %v314 = vrot.slane %v313, 4
          %v315 = vadd.f32 %v313, %v314
          %v316 = vrot.slane %v315, 2
          %v317 = vadd.f32 %v315, %v316
          %v318 = vrot.slane %v317, 1
          %v319 = vadd.f32 %v317, %v318
          %v320 = vadd.f32 %v276, %v280
          %v321 = vadd.f32 %v320, %v284
          %v322 = vadd.f32 %v321, %v288
          %v323 = vadd.f32 %v322, %v292
          %v324 = vadd.f32 %v323, %v296
          %v325 = vadd.f32 %v324, %v300
          %v326 = vadd.f32 %v325, %v304
          %v327 = vrot.slane %v326, 4
          %v328 = vadd.f32 %v326, %v327
          %v329 = vrot.slane %v328, 2
          %v330 = vadd.f32 %v328, %v329
          %v331 = vrot.slane %v330, 1
          %v332 = vadd.f32 %v330, %v331
          %v333 = vadd.f32 %v277, %v281
          %v334 = vadd.f32 %v333, %v285
          %v335 = vadd.f32 %v334, %v289
          %v336 = vadd.f32 %v335, %v293
          %v337 = vadd.f32 %v336, %v297
          %v338 = vadd.f32 %v337, %v301
          %v339 = vadd.f32 %v338, %v305
          %v340 = vrot.slane %v339, 4
          %v341 = vadd.f32 %v339, %v340
          %v342 = vrot.slane %v341, 2
          %v343 = vadd.f32 %v341, %v342
          %v344 = vrot.slane %v343, 1
          %v345 = vadd.f32 %v343, %v344
          %v346 = vadd.f32 %v278, %v282
          %v347 = vadd.f32 %v346, %v286
          %v348 = vadd.f32 %v347, %v290
          %v349 = vadd.f32 %v348, %v294
          %v350 = vadd.f32 %v349, %v298
          %v351 = vadd.f32 %v350, %v302
          %v352 = vadd.f32 %v351, %v306
          %v353 = vrot.slane %v352, 4
          %v354 = vadd.f32 %v352, %v353
          %v355 = vrot.slane %v354, 2
          %v356 = vadd.f32 %v354, %v355
          %v357 = vrot.slane %v356, 1
          %v358 = vadd.f32 %v356, %v357
          %v359 = vmax.f32 %v319, 1e-24
          %v360 = vmax.f32 %v332, 1e-24
          %v361 = vmax.f32 %v345, 1e-24
          %v362 = vmax.f32 %v358, 1e-24
          %v363 = vrsqrt.pop %v359
          %v364 = vrsqrt.pop %v360
          %v365 = vrsqrt.pop %v361
          %v366 = vrsqrt.pop %v362
          %v367 = vmul.f32 %v243, %v363
          %v368 = vmul.f32 %v244, %v364
          %v369 = vmul.f32 %v245, %v365
          %v370 = vmul.f32 %v246, %v366
          %v371 = vmul.f32 %v247, %v363
          %v372 = vmul.f32 %v248, %v364
          %v373 = vmul.f32 %v249, %v365
          %v374 = vmul.f32 %v250, %v366
          %v375 = vmul.f32 %v251, %v363
          %v376 = vmul.f32 %v252, %v364
          %v377 = vmul.f32 %v253, %v365
          %v378 = vmul.f32 %v254, %v366
          %v379 = vmul.f32 %v255, %v363
          %v380 = vmul.f32 %v256, %v364
          %v381 = vmul.f32 %v257, %v365
          %v382 = vmul.f32 %v258, %v366
          %v383 = vmul.f32 %v259, %v363
          %v384 = vmul.f32 %v260, %v364
          %v385 = vmul.f32 %v261, %v365
          %v386 = vmul.f32 %v262, %v366
          %v387 = vmul.f32 %v263, %v363
          %v388 = vmul.f32 %v264, %v364
          %v389 = vmul.f32 %v265, %v365
          %v390 = vmul.f32 %v266, %v366
          %v391 = vmul.f32 %v267, %v363
          %v392 = vmul.f32 %v268, %v364
          %v393 = vmul.f32 %v269, %v365
          %v394 = vmul.f32 %v270, %v366
          %v395 = vmul.f32 %v271, %v363
          %v396 = vmul.f32 %v272, %v364
          %v397 = vmul.f32 %v273, %v365
          %v398 = vmul.f32 %v274, %v366
          %399 = vst [vmem:[#allocation2] sm:$0xff] %v367
          %400 = vst [vmem:[#allocation2 + $0x8] sm:$0xff] %v368
          %401 = vst [vmem:[#allocation2 + $0x10] sm:$0xff] %v369
          %402 = vst [vmem:[#allocation2 + $0x18] sm:$0xff] %v370
          %403 = vst [vmem:[#allocation2 + $0x20] sm:$0xff] %v371
          %404 = vst [vmem:[#allocation2 + $0x28] sm:$0xff] %v372
          %405 = vst [vmem:[#allocation2 + $0x30] sm:$0xff] %v373
          %406 = vst [vmem:[#allocation2 + $0x38] sm:$0xff] %v374
          %407 = vst [vmem:[#allocation2 + $0x40] sm:$0xff] %v375
          %408 = vst [vmem:[#allocation2 + $0x48] sm:$0xff] %v376
          %409 = vst [vmem:[#allocation2 + $0x50] sm:$0xff] %v377
          %410 = vst [vmem:[#allocation2 + $0x58] sm:$0xff] %v378
          %411 = vst [vmem:[#allocation2 + $0x60] sm:$0xff] %v379
          %412 = vst [vmem:[#allocation2 + $0x68] sm:$0xff] %v380
          %413 = vst [vmem:[#allocation2 + $0x70] sm:$0xff] %v381
          %414 = vst [vmem:[#allocation2 + $0x78] sm:$0xff] %v382
          %415 = vst [vmem:[#allocation2 + $0x80] sm:$0xff] %v383
          %416 = vst [vmem:[#allocation2 + $0x88] sm:$0xff] %v384
          %417 = vst [vmem:[#allocation2 + $0x90] sm:$0xff] %v385
          %418 = vst [vmem:[#allocation2 + $0x98] sm:$0xff] %v386
          %419 = vst [vmem:[#allocation2 + $0xa0] sm:$0xff] %v387
          %420 = vst [vmem:[#allocation2 + $0xa8] sm:$0xff] %v388
          %421 = vst [vmem:[#allocation2 + $0xb0] sm:$0xff] %v389
          %422 = vst [vmem:[#allocation2 + $0xb8] sm:$0xff] %v390
          %423 = vst [vmem:[#allocation2 + $0xc0] sm:$0xff] %v391
          %424 = vst [vmem:[#allocation2 + $0xc8] sm:$0xff] %v392
          %425 = vst [vmem:[#allocation2 + $0xd0] sm:$0xff] %v393
          %426 = vst [vmem:[#allocation2 + $0xd8] sm:$0xff] %v394
          %427 = vst [vmem:[#allocation2 + $0xe0] sm:$0xff] %v395
          %428 = vst [vmem:[#allocation2 + $0xe8] sm:$0xff] %v396
          %429 = vst [vmem:[#allocation2 + $0xf0] sm:$0xff] %v397
          %430 = vst [vmem:[#allocation2 + $0xf8] sm:$0xff] %v398
        $region40: #{tpu_custom_call.1} parent=31 // pred_fallthru
          _
        %v431 = vld [vmem:[%s232] sm:$0xff]
        %v432 = vmul.f32 %v431, %v431
        %vm433 = vcmask 523264
        %v434 = vsel %vm433, %v432, 0.0
        %435 = vadd.xlane.f32.xlu0 %v434
        %v436 = vpop.xlane.xlu0 %435
        %v437 = vmax.f32 %v436, 1e-24
        %v438 = vrsqrt.pop %v437
        %v439 = vmul.f32 %v431, %v438
        %v440 = vld [vmem:[#allocation2] sm:$0xff]
        %v441 = vld [vmem:[#allocation2 + $0x8] sm:$0xff]
        %v442 = vld [vmem:[#allocation2 + $0x10] sm:$0xff]
        %v443 = vld [vmem:[#allocation2 + $0x18] sm:$0xff]
        %v444 = vld [vmem:[#allocation2 + $0x20] sm:$0xff]
        %v445 = vld [vmem:[#allocation2 + $0x28] sm:$0xff]
        %v446 = vld [vmem:[#allocation2 + $0x30] sm:$0xff]
        %v447 = vld [vmem:[#allocation2 + $0x38] sm:$0xff]
        %v448 = vld [vmem:[#allocation2 + $0x40] sm:$0xff]
        %v449 = vld [vmem:[#allocation2 + $0x48] sm:$0xff]
        %v450 = vld [vmem:[#allocation2 + $0x50] sm:$0xff]
        %v451 = vld [vmem:[#allocation2 + $0x58] sm:$0xff]
        %v452 = vld [vmem:[#allocation2 + $0x60] sm:$0xff]
        %v453 = vld [vmem:[#allocation2 + $0x68] sm:$0xff]
        %v454 = vld [vmem:[#allocation2 + $0x70] sm:$0xff]
        %v455 = vld [vmem:[#allocation2 + $0x78] sm:$0xff]
        %v456 = vld [vmem:[#allocation2 + $0x80] sm:$0xff]
        %v457 = vld [vmem:[#allocation2 + $0x88] sm:$0xff]
        %v458 = vld [vmem:[#allocation2 + $0x90] sm:$0xff]
        %v459 = vld [vmem:[#allocation2 + $0x98] sm:$0xff]
        %v460 = vld [vmem:[#allocation2 + $0xa0] sm:$0xff]
        %v461 = vld [vmem:[#allocation2 + $0xa8] sm:$0xff]
        %v462 = vld [vmem:[#allocation2 + $0xb0] sm:$0xff]
        %v463 = vld [vmem:[#allocation2 + $0xb8] sm:$0xff]
        %v464 = vld [vmem:[#allocation2 + $0xc0] sm:$0xff]
        %v465 = vld [vmem:[#allocation2 + $0xc8] sm:$0xff]
        %v466 = vld [vmem:[#allocation2 + $0xd0] sm:$0xff]
        %v467 = vld [vmem:[#allocation2 + $0xd8] sm:$0xff]
        %v468 = vld [vmem:[#allocation2 + $0xe0] sm:$0xff]
        %v469 = vld [vmem:[#allocation2 + $0xe8] sm:$0xff]
        %v470 = vld [vmem:[#allocation2 + $0xf0] sm:$0xff]
        %v471 = vld [vmem:[#allocation2 + $0xf8] sm:$0xff]
        %v473 = vsel %vm433, %v439, 0
        %475 = vmatprep.subr.mxu0 %v441
        %476 = vmatpush1.msra.mxu0 %v440
        %477 = vmatprep.subr.mxu0 %v445
        %478 = vmatpush1.msra.mxu0 %v444
        %479 = vmatprep.subr.mxu0 %v449
        %480 = vmatpush1.msra.mxu0 %v448
        %481 = vmatprep.subr.mxu0 %v453
        %482 = vmatpush1.msra.mxu0 %v452
        %483 = vmatprep.subr.mxu0 %v457
        %484 = vmatpush1.msra.mxu0 %v456
        %485 = vmatprep.subr.mxu0 %v461
        %486 = vmatpush1.msra.mxu0 %v460
        %487 = vmatprep.subr.mxu0 %v465
        %488 = vmatpush1.msra.mxu0 %v464
        %489 = vmatprep.subr.mxu0 %v469
        %490 = vmatpush1.msra.mxu0 %v468
        %491 = vmatprep.subr.mxu0 0.0
        %492 = vmatpush1.msra.mxu0 0.0
        %493 = vmatprep.subr.mxu0 0.0
        %494 = vmatpush1.msra.mxu0 0.0
        %495 = vmatprep.subr.mxu0 0.0
        %496 = vmatpush1.msra.mxu0 0.0
        %497 = vmatprep.subr.mxu0 0.0
        %498 = vmatpush1.msra.mxu0 0.0
        %499 = vmatprep.subr.mxu0 0.0
        %500 = vmatpush1.msra.mxu0 0.0
        %501 = vmatprep.subr.mxu0 0.0
        %502 = vmatpush1.msra.mxu0 0.0
        %503 = vmatprep.subr.mxu0 0.0
        %504 = vmatpush1.msra.mxu0 0.0
        %505 = vmatprep.subr.mxu0 0.0
        %506 = vmatpush1.msra.mxu0 0.0
        %507 = vmatprep.subr.mxu0 0.0
        %508 = vmatpush1.msra.mxu0 0.0
        %509 = vmatprep.subr.mxu0 0.0
        %510 = vmatpush1.msra.mxu0 0.0
        %511 = vmatprep.subr.mxu0 0.0
        %512 = vmatpush1.msra.mxu0 0.0
        %513 = vmatprep.subr.mxu0 0.0
        %514 = vmatpush1.msra.mxu0 0.0
        %515 = vmatprep.subr.mxu0 0.0
        %516 = vmatpush1.msra.mxu0 0.0
        %517 = vmatprep.subr.mxu0 0.0
        %518 = vmatpush1.msra.mxu0 0.0
        %519 = vmatprep.subr.mxu0 0.0
        %520 = vmatpush1.msra.mxu0 0.0
        %521 = vmatprep.subr.mxu0 0.0
        %522 = vmatpush1.msra.mxu0 0.0
        %523 = vmatprep.subr.mxu0 0.0
        %524 = vmatpush1.msra.mxu0 0.0
        %525 = vmatprep.subr.mxu0 0.0
        %526 = vmatpush1.msra.mxu0 0.0
        %527 = vmatprep.subr.mxu0 0.0
        %528 = vmatpush1.msra.mxu0 0.0
        %529 = vmatprep.subr.mxu0 0.0
        %530 = vmatpush1.msra.mxu0 0.0
        %531 = vmatprep.subr.mxu0 0.0
        %532 = vmatpush1.msra.mxu0 0.0
        %533 = vmatprep.subr.mxu0 0.0
        %534 = vmatpush1.msra.mxu0 0.0
        %535 = vmatprep.subr.mxu0 0.0
        %536 = vmatpush1.msra.mxu0 0.0
        %537 = vmatprep.subr.mxu0 0.0
        %538 = vmatpush1.msra.mxu0 0.0
        %539 = vmatprep.mubr.f32.mxu0 0.0
        %540 = vmatmul.mubr.f32.gmra.mrb[0].mxu0 %v473
        %v541 = vpop.f32.mrb[0].mxu0
        %v542 = vadd.f32 0.0, %v541
        %v543 = vpop.f32.mrb[0].mxu0
        %v544 = vadd.f32 0.0, %v543
        %545 = vdwg.mxu0
        %546 = vmatprep.subr.mxu0 %v443
        %547 = vmatpush1.msra.mxu0 %v442
        %548 = vmatprep.subr.mxu0 %v447
        %549 = vmatpush1.msra.mxu0 %v446
        %550 = vmatprep.subr.mxu0 %v451
        %551 = vmatpush1.msra.mxu0 %v450
        %552 = vmatprep.subr.mxu0 %v455
        %553 = vmatpush1.msra.mxu0 %v454
        %554 = vmatprep.subr.mxu0 %v459
        %555 = vmatpush1.msra.mxu0 %v458
        %556 = vmatprep.subr.mxu0 %v463
        %557 = vmatpush1.msra.mxu0 %v462
        %558 = vmatprep.subr.mxu0 %v467
        %559 = vmatpush1.msra.mxu0 %v466
        %560 = vmatprep.subr.mxu0 %v471
        %561 = vmatpush1.msra.mxu0 %v470
        %562 = vmatprep.subr.mxu0 0.0
        %563 = vmatpush1.msra.mxu0 0.0
        %564 = vmatprep.subr.mxu0 0.0
        %565 = vmatpush1.msra.mxu0 0.0
        %566 = vmatprep.subr.mxu0 0.0
        %567 = vmatpush1.msra.mxu0 0.0
        %568 = vmatprep.subr.mxu0 0.0
        %569 = vmatpush1.msra.mxu0 0.0
        %570 = vmatprep.subr.mxu0 0.0
        %571 = vmatpush1.msra.mxu0 0.0
        %572 = vmatprep.subr.mxu0 0.0
        %573 = vmatpush1.msra.mxu0 0.0
        %574 = vmatprep.subr.mxu0 0.0
        %575 = vmatpush1.msra.mxu0 0.0
        %576 = vmatprep.subr.mxu0 0.0
        %577 = vmatpush1.msra.mxu0 0.0
        %578 = vmatprep.subr.mxu0 0.0
        %579 = vmatpush1.msra.mxu0 0.0
        %580 = vmatprep.subr.mxu0 0.0
        %581 = vmatpush1.msra.mxu0 0.0
        %582 = vmatprep.subr.mxu0 0.0
        %583 = vmatpush1.msra.mxu0 0.0
        %584 = vmatprep.subr.mxu0 0.0
        %585 = vmatpush1.msra.mxu0 0.0
        %586 = vmatprep.subr.mxu0 0.0
        %587 = vmatpush1.msra.mxu0 0.0
        %588 = vmatprep.subr.mxu0 0.0
        %589 = vmatpush1.msra.mxu0 0.0
        %590 = vmatprep.subr.mxu0 0.0
        %591 = vmatpush1.msra.mxu0 0.0
        %592 = vmatprep.subr.mxu0 0.0
        %593 = vmatpush1.msra.mxu0 0.0
        %594 = vmatprep.subr.mxu0 0.0
        %595 = vmatpush1.msra.mxu0 0.0
        %596 = vmatprep.subr.mxu0 0.0
        %597 = vmatpush1.msra.mxu0 0.0
        %598 = vmatprep.subr.mxu0 0.0
        %599 = vmatpush1.msra.mxu0 0.0
        %600 = vmatprep.subr.mxu0 0.0
        %601 = vmatpush1.msra.mxu0 0.0
        %602 = vmatprep.subr.mxu0 0.0
        %603 = vmatpush1.msra.mxu0 0.0
        %604 = vmatprep.subr.mxu0 0.0
        %605 = vmatpush1.msra.mxu0 0.0
        %606 = vmatprep.subr.mxu0 0.0
        %607 = vmatpush1.msra.mxu0 0.0
        %608 = vmatprep.subr.mxu0 0.0
        %609 = vmatpush1.msra.mxu0 0.0
        %610 = vmatprep.mubr.f32.mxu0 0.0
        %611 = vmatmul.mubr.f32.gmra.mrb[0].mxu0 %v473
        %v612 = vpop.f32.mrb[0].mxu0
        %v613 = vadd.f32 0.0, %v612
        %v614 = vpop.f32.mrb[0].mxu0
        %v615 = vadd.f32 0.0, %v614
        %616 = vdwg.mxu0
        %v617 = vmul.f32 %v542, %v542
        %v618 = vmul.f32 %v544, %v544
        %v619 = vmul.f32 %v613, %v613
        %v620 = vmul.f32 %v615, %v615
        %v621 = vsub.f32 1.0, %v617
        %v622 = vsub.f32 1.0, %v618
        %v623 = vsub.f32 1.0, %v619
        %v624 = vsub.f32 1.0, %v620
        %v625 = vmax.f32 %v621, 0.0
        %v626 = vmax.f32 %v622, 0.0
        %v627 = vmax.f32 %v623, 0.0
        %v628 = vmax.f32 %v624, 0.0
        %v629 = vrsqrt.pop %v625
        %v630 = vmul.f32 %v625, %v629
        %vm631 = vcmp.eq.f32.partialorder %v625, inf
        %v632 = vsel %vm631, %v625, %v630
        %vm633 = vcmp.eq.f32.partialorder %v625, 0.0
        %v634 = vand.u32 %v625, 2147483648
        %v635 = vsel %vm633, %v634, %v632
        %v636 = vrsqrt.pop %v626
        %v637 = vmul.f32 %v626, %v636
        %vm638 = vcmp.eq.f32.partialorder %v626, inf
        %v639 = vsel %vm638, %v626, %v637
        %vm640 = vcmp.eq.f32.partialorder %v626, 0.0
        %v641 = vand.u32 %v626, 2147483648
        %v642 = vsel %vm640, %v641, %v639
        %v643 = vrsqrt.pop %v627
        %v644 = vmul.f32 %v627, %v643
        %vm645 = vcmp.eq.f32.partialorder %v627, inf
        %v646 = vsel %vm645, %v627, %v644
        %vm647 = vcmp.eq.f32.partialorder %v627, 0.0
        %v648 = vand.u32 %v627, 2147483648
        %v649 = vsel %vm647, %v648, %v646
        %v650 = vrsqrt.pop %v628
        %v651 = vmul.f32 %v628, %v650
        %vm652 = vcmp.eq.f32.partialorder %v628, inf
        %v653 = vsel %vm652, %v628, %v651
        %vm654 = vcmp.eq.f32.partialorder %v628, 0.0
        %v655 = vand.u32 %v628, 2147483648
        %v656 = vsel %vm654, %v655, %v653
        %v657 = vmul.f32 %v542, 0.87758255
        %v658 = vmul.f32 %v544, 0.87758255
        %v659 = vmul.f32 %v613, 0.87758255
        %v660 = vmul.f32 %v615, 0.87758255
        %v661 = vmul.f32 %v635, 0.47942555
        %v662 = vmul.f32 %v642, 0.47942555
        %v663 = vmul.f32 %v649, 0.47942555
        %v664 = vmul.f32 %v656, 0.47942555
        %v665 = vsub.f32 %v657, %v661
        %v666 = vsub.f32 %v658, %v662
        %v667 = vsub.f32 %v659, %v663
        %v668 = vsub.f32 %v660, %v664
        %v669 = vld [vmem:[%s237] sm:$0xff]
        %v670 = vlaneseq
        %v671 = vand.u32 %v670, 127
        %v672 = vadd.s32 %v671, 128
        %v673 = vadd.s32 %v671, 256
        %v674 = vadd.s32 %v671, 384
        %s675 = smul.u32 %s24, 512
        %v676 = vstv %s675
        %v677 = vadd.s32 %v671, %v676
        %v678 = vadd.s32 %v672, %v676
        %v679 = vadd.s32 %v673, %v676
        %v680 = vadd.s32 %v674, %v676
        %681 = vset.pattern.permute.xlu0 0
        %682 = vperm.xlu0 %681, %v669
        %v683 = vpop.permute.xlu0 %682
        %vm684 = vcmp.eq.s32.totalorder %v677, %v683
        %vm685 = vcmp.eq.s32.totalorder %v678, %v683
        %vm686 = vcmp.eq.s32.totalorder %v679, %v683
        %vm687 = vcmp.eq.s32.totalorder %v680, %v683
        %v688 = vmul.f32 %v665, 30.0
        %v689 = vmul.f32 %v666, 30.0
        %v690 = vmul.f32 %v667, 30.0
        %v691 = vmul.f32 %v668, 30.0
        %v692 = vsel %vm684, %v688, %v542
        %v693 = vsel %vm685, %v689, %v544
        %v694 = vsel %vm686, %v690, %v613
        %v695 = vsel %vm687, %v691, %v615
        %696 = vst [vmem:[%s228] sm:$0xff] %v692
        %697 = vst [vmem:[%s228 + $0x8] sm:$0xff] %v693
        %698 = vst [vmem:[%s228 + $0x10] sm:$0xff] %v694
        %699 = vst [vmem:[%s228 + $0x18] sm:$0xff] %v695
        %s700 = sand.u32 %s120, 1
        %s701 = scalar_lea.sflag [#allocation5], %s700
        %s702 = sand.u32 %s120, 1
        %s703 = smul.addr %s702, 32
        %s704 = scalar_lea.vmem [#allocation6], %s703
        // Predicated region
        $region41: #{tpu_custom_call.1} parent=31 // pred_check
          %p705 = pneg %p130
        $region42: #{tpu_custom_call.1} parent=31 // pred_check_branch
          %707 = sbr.rel (%p705) target = $region44
        $region43: #{tpu_custom_call.1} parent=31 // pred_region
          %s708 = smul.u32 4, %s24
          %s710 = ssub.s32 512, 512
          %711 = vsyncadd %s701, %s710
          %s712 = smul.addr %s25, 8
          %s713 = sadd.s32 %s708, %s712
          %s714 = smul.addr %s713, 128
          %s715 = scalar_lea.hbm %s3, %s714
          %s717 = sshll.u32 %s704, 4
          %s718 = int_to_ptr.vmem [resolvable:$true] %s717
          %720 = dma.vmem_to_hbm [thread:$0]  %s718, 512, %s715, %s701
        $region44: #{tpu_custom_call.1} parent=31 // pred_fallthru
          _
      $region32: #{tpu_custom_call.1} parent=5 // pred_fallthru
        _
      %p721 = scmp.le.s32.totalorder 2, %s15
      // Predicated region
      $region45: #{tpu_custom_call.1} parent=5 // pred_check
        %p722 = pneg %p721
      $region46: #{tpu_custom_call.1} parent=5 // pred_check_branch
        %724 = sbr.rel (%p722) target = $region48
      $region47: #{tpu_custom_call.1} parent=5 // pred_region
        %s725 = ssub.s32 %s15, 2
        // Predicated region
        $region49: #{tpu_custom_call.1} parent=47 // pred_check
          %p726 = pneg %p136
        $region50: #{tpu_custom_call.1} parent=47 // pred_check_branch
          %728 = sbr.rel (%p726) target = $region52
        $region51: #{tpu_custom_call.1} parent=47 // pred_region
          %s729 = sand.u32 %s121, 1
          %s730 = scalar_lea.sflag [#allocation5], %s729
          %s731 = sand.u32 %s121, 1
          %s732 = smul.addr %s731, 32
          %s733 = scalar_lea.vmem [#allocation6], %s732
          %734 = dma.done %s730, 512
        $region52: #{tpu_custom_call.1} parent=47 // pred_fallthru
          _
      $region48: #{tpu_custom_call.1} parent=5 // pred_fallthru
        _
    $region6: #{tpu_custom_call.1} parent=1 // loop_footer
      %s19 = sadd.s32 1, %s15
    $region7: #{tpu_custom_call.1} parent=1 // loop_footer_branch
      %14 = sbr.rel target = $region3
    $region8: #{tpu_custom_call.1} parent=1 // loop_exit
      _
    %735 = vsyncpa [#allocation4], 1
    %s736 = scalar_lea.sflag [#allocation4], 1
    %737 = vsyncpa %s736, 1
    %738 = vsyncpa [#allocation5], 1
    %s739 = scalar_lea.sflag [#allocation5], 1
    %740 = vsyncpa %s739, 1

</llo_original>
